<compile_context>
chip_gen: v7x
topology: tpu7x:2x2x1
jax: 0.10.0
libtpu: 0.0.40
codegen_flags: <defaults>
</compile_context>

<pallas_src>
import functools

import jax
import jax.numpy as jnp
from jax.experimental import pallas as pl
from jax.experimental.pallas import tpu as pltpu

F_DIM = 1536  # 3 x (256 re + 256 im)


def _rotate_knowledge_kernel(tri_ref, out_ref, *, block_rows, n_rows):
    i = pl.program_id(0)

    # Slice the six complex components straight off the ref; each is a
    # 128-aligned 256-lane window, so these loads are relayout-free.
    h_re = tri_ref[:, 0:256]
    h_im = tri_ref[:, 256:512]
    r_re = tri_ref[:, 512:768]
    r_im = tri_ref[:, 768:1024]
    t_re = tri_ref[:, 1024:1280]
    t_im = tri_ref[:, 1280:1536]

    re_score = h_re * r_re - h_im * r_im - t_re
    # Note: "+ h_im + r_re" (not h_im * r_re) intentionally reproduces the
    # PyTorch reference exactly. Do not "fix" to standard RotatE.
    im_score = h_re * r_im + h_im + r_re - t_im

    # torch.stack([re, im], 0).norm(dim=0) == sqrt(re^2 + im^2)
    score = jnp.sqrt(re_score * re_score + im_score * im_score)  # (block, 256)
    s = jnp.sum(score, axis=-1, keepdims=True)                   # (block, 1)

    # Mask rows past the true row count (the last, possibly partial, tile is
    # padded with unspecified data; where-select discards any NaN/Inf there).
    row_ids = i * block_rows + jax.lax.broadcasted_iota(jnp.int32, s.shape, 0)
    contrib = jnp.where(row_ids < n_rows, -jax.nn.log_sigmoid(-s),
                        jnp.zeros_like(s))

    tile_sum = jnp.sum(contrib)
    # Lane/sublane-dense (1, 8, 128) slab, same scalar in every element; the
    # wrapper reads [tile, 0, 0]. Write traffic: 4 KiB/tile (negligible).
    out_ref[...] = jnp.full(out_ref.shape, tile_sum, dtype=out_ref.dtype)


def rotate_knowledge_forward(tri_feat_org, alpha, mask, gamma=6.0,
                             tile_rows=512):
    """Pallas implementation of RotateKnowledge.forward.

    tri_feat_org: (B, R, 1536) float32
    alpha:        (B, S, R)    float32 (unused by the active reference code)
    mask:         (B, S)                (only sum(mask) is used)
    returns: scalar float32
    """
    del alpha, gamma  # unused in the reference forward's active code path
    B, R, F = tri_feat_org.shape
    assert F == F_DIM, f"f_dim must be {F_DIM}"

    numtrue = jnp.sum(mask.astype(jnp.float32))  # scalar glue

    # TODO(synk): a bf16 input path would halve HBM traffic (~2x) once the
    # model tolerates it; kept f32 here to match the reference numerics.
    x = tri_feat_org.reshape(B * R, F)
    if x.dtype != jnp.float32:
        x = x.astype(jnp.float32)
    n_rows = B * R

    # Round the requested tile up to a sublane multiple; tiny inputs get one
    # block covering all rows (grid=(1,)), skipping per-step pipeline cost.
    tile_rows = max(8, -(-int(tile_rows) // 8) * 8)
    block_rows = n_rows if n_rows <= tile_rows else tile_rows
    num_tiles = pl.cdiv(n_rows, block_rows)

    kernel = functools.partial(_rotate_knowledge_kernel,
                               block_rows=block_rows, n_rows=n_rows)

    cost = pl.CostEstimate(
        flops=13 * 256 * n_rows,
        transcendentals=260 * n_rows,            # sqrt + exp/log in logsigmoid
        bytes_accessed=n_rows * F * 4 + num_tiles * 8 * 128 * 4,
    )

    partials = pl.pallas_call(
        kernel,
        out_shape=jax.ShapeDtypeStruct((num_tiles, 8, 128), jnp.float32),
        grid=(num_tiles,),
        in_specs=[pl.BlockSpec((block_rows, F), lambda i: (i, 0))],
        out_specs=pl.BlockSpec((1, 8, 128), lambda i: (i, 0, 0)),
        compiler_params=pltpu.CompilerParams(
            dimension_semantics=("parallel",),
            vmem_limit_bytes=32 * 1024 * 1024,
        ),
        cost_estimate=cost,
    )(x)

    total = jnp.sum(partials[:, 0, 0])
    return total / numtrue


def _reference_forward(tri_feat_org, alpha, mask):
    """Plain-JAX reference mirroring the PyTorch code, for verification."""
    del alpha
    numtrue = jnp.sum(mask)
    h_re = tri_feat_org[..., 0:256]
    h_im = tri_feat_org[..., 256:512]
    r_re = tri_feat_org[..., 512:768]
    r_im = tri_feat_org[..., 768:1024]
    t_re = tri_feat_org[..., 1024:1280]
    t_im = tri_feat_org[..., 1280:1536]
    re_score = h_re * r_re - h_im * r_im - t_re
    im_score = h_re * r_im + h_im + r_re - t_im
    score = jnp.sqrt(re_score ** 2 + im_score ** 2)
    score = jnp.sum(score, axis=2)
    return -jnp.sum(jax.nn.log_sigmoid(-score)) / numtrue


if __name__ == "__main__":
    key = jax.random.PRNGKey(0)
    k1, k2, k3, k4 = jax.random.split(key, 4)

    # ---- Case 1: small shapes from the module spec (single-block path) ----
    batch, rel_num, seq_len = 2, 8, 8
    tri_feat_org = jax.random.normal(k1, (batch, rel_num, F_DIM),
                                     dtype=jnp.float32) * 0.1
    alpha = jax.random.uniform(k2, (batch, seq_len, rel_num), dtype=jnp.float32)
    mask = (jax.random.uniform(k3, (batch, seq_len)) > 0.3).astype(jnp.float32)
    mask = mask.at[0, 0].set(1.0)  # guarantee numtrue > 0

    gamma = jnp.array([6.0], dtype=jnp.float32)  # unused in forward

    out = rotate_knowledge_forward(tri_feat_org, alpha, mask,
                                   gamma=float(gamma[0]))
    out = jax.block_until_ready(out)
    ref = _reference_forward(tri_feat_org, alpha, mask)
    assert jnp.allclose(out, ref, rtol=1e-5, atol=1e-5), (out, ref)

    # ---- Case 2: multi-tile path with a ragged (masked) last tile ----
    batch2, rel_num2 = 2, 13  # 26 rows, tile_rows=8 -> 4 tiles, last partial
    tri2 = jax.random.normal(k4, (batch2, rel_num2, F_DIM),
                             dtype=jnp.float32) * 0.1
    out2 = rotate_knowledge_forward(tri2, alpha, mask,
                                    gamma=float(gamma[0]), tile_rows=8)
    out2 = jax.block_until_ready(out2)
    ref2 = _reference_forward(tri2, alpha, mask)
    assert jnp.allclose(out2, ref2, rtol=1e-5, atol=1e-5), (out2, ref2)

    print("KERNEL_OK")
</pallas_src>

<mosaic_0001>
module attributes {stable_mosaic.version = 11 : i64} {
  func.func @_rotate_knowledge_kernel(%arg0: i32, %arg1: memref<16x1536xf32, #tpu.memory_space<vmem>>, %arg2: memref<1x8x128xf32, #tpu.memory_space<vmem>>) attributes {dimension_semantics = [#tpu.dimension_semantics<parallel>], iteration_bounds = array<i64: 1>, scalar_prefetch = 0 : i64, scratch_operands = 0 : i64, tpu.core_type = #tpu.core_type<tc>, window_params = [{transform_indices = @transform_0, window_bounds = array<i64: 16, 1536>}, {transform_indices = @transform_1, window_bounds = array<i64: 1, 8, 128>}]} {
    %c0 = arith.constant 0 : index
    %c0_0 = arith.constant 0 : index
    %0 = vector.load %arg1[%c0, %c0_0] : memref<16x1536xf32, #tpu.memory_space<vmem>>, vector<16x256xf32>
    %c0_1 = arith.constant 0 : index
    %c256 = arith.constant 256 : index
    %1 = vector.load %arg1[%c0_1, %c256] : memref<16x1536xf32, #tpu.memory_space<vmem>>, vector<16x256xf32>
    %c0_2 = arith.constant 0 : index
    %c512 = arith.constant 512 : index
    %2 = vector.load %arg1[%c0_2, %c512] : memref<16x1536xf32, #tpu.memory_space<vmem>>, vector<16x256xf32>
    %c0_3 = arith.constant 0 : index
    %c768 = arith.constant 768 : index
    %3 = vector.load %arg1[%c0_3, %c768] : memref<16x1536xf32, #tpu.memory_space<vmem>>, vector<16x256xf32>
    %c0_4 = arith.constant 0 : index
    %c1024 = arith.constant 1024 : index
    %4 = vector.load %arg1[%c0_4, %c1024] : memref<16x1536xf32, #tpu.memory_space<vmem>>, vector<16x256xf32>
    %c0_5 = arith.constant 0 : index
    %c1280 = arith.constant 1280 : index
    %5 = vector.load %arg1[%c0_5, %c1280] : memref<16x1536xf32, #tpu.memory_space<vmem>>, vector<16x256xf32>
    %6 = arith.mulf %0, %2 : vector<16x256xf32>
    %7 = arith.mulf %1, %3 : vector<16x256xf32>
    %8 = arith.subf %6, %7 : vector<16x256xf32>
    %9 = arith.subf %8, %4 : vector<16x256xf32>
    %10 = arith.mulf %0, %3 : vector<16x256xf32>
    %11 = arith.addf %10, %1 : vector<16x256xf32>
    %12 = arith.addf %11, %2 : vector<16x256xf32>
    %13 = arith.subf %12, %5 : vector<16x256xf32>
    %14 = arith.mulf %9, %9 : vector<16x256xf32>
    %15 = arith.mulf %13, %13 : vector<16x256xf32>
    %16 = arith.addf %14, %15 : vector<16x256xf32>
    %17 = math.sqrt %16 : vector<16x256xf32>
    %cst = arith.constant dense<0.000000e+00> : vector<16xf32>
    %18 = vector.multi_reduction <add>, %17, %cst [1] : vector<16x256xf32> to vector<16xf32>
    %19 = vector.shape_cast %18 : vector<16xf32> to vector<16x1xf32>
    %c16_i32 = arith.constant 16 : i32
    %20 = arith.muli %arg0, %c16_i32 : i32
    %21 = tpu.iota {dimensions = array<i32: 0>} : vector<16x1xi32>
    %22 = vector.broadcast %20 : i32 to vector<16x1xi32>
    %23 = arith.addi %22, %21 : vector<16x1xi32>
    %c16_i32_6 = arith.constant 16 : i32
    %24 = vector.broadcast %c16_i32_6 : i32 to vector<16x1xi32>
    %25 = arith.cmpi slt, %23, %24 : vector<16x1xi32>
    %cst_7 = arith.constant 0.000000e+00 : f32
    %26 = vector.broadcast %cst_7 : f32 to vector<16x1xf32>
    %27 = arith.subf %26, %19 : vector<16x1xf32>
    %cst_8 = arith.constant 0.000000e+00 : f32
    %28 = vector.broadcast %cst_8 : f32 to vector<16x1xf32>
    %29 = arith.subf %28, %27 : vector<16x1xf32>
    %cst_9 = arith.constant 0.000000e+00 : f32
    %30 = vector.broadcast %cst_9 : f32 to vector<16x1xf32>
    %31 = arith.maximumf %29, %30 : vector<16x1xf32>
    %32 = vector.broadcast %cst_9 : f32 to vector<16x1xf32>
    %33 = arith.subf %29, %32 : vector<16x1xf32>
    %34 = arith.cmpf one, %33, %33 : vector<16x1xf32>
    %35 = vector.broadcast %cst_9 : f32 to vector<16x1xf32>
    %36 = arith.addf %29, %35 : vector<16x1xf32>
    %37 = math.absf %33 : vector<16x1xf32>
    %cst_10 = arith.constant 0.000000e+00 : f32
    %38 = vector.broadcast %cst_10 : f32 to vector<16x1xf32>
    %39 = arith.subf %38, %37 : vector<16x1xf32>
    %40 = math.exp %39 : vector<16x1xf32>
    %41 = math.log1p %40 : vector<16x1xf32>
    %42 = arith.addf %31, %41 : vector<16x1xf32>
    %43 = arith.select %34, %36, %42 : vector<16x1xi1>, vector<16x1xf32>
    %cst_11 = arith.constant 0.000000e+00 : f32
    %44 = vector.broadcast %cst_11 : f32 to vector<16x1xf32>
    %45 = arith.subf %44, %43 : vector<16x1xf32>
    %cst_12 = arith.constant 0.000000e+00 : f32
    %46 = vector.broadcast %cst_12 : f32 to vector<16x1xf32>
    %47 = arith.subf %46, %45 : vector<16x1xf32>
    %cst_13 = arith.constant 0.000000e+00 : f32
    %48 = vector.broadcast %cst_13 : f32 to vector<16x1xf32>
    %49 = arith.select %25, %47, %48 : vector<16x1xi1>, vector<16x1xf32>
    %50 = vector.shape_cast %49 : vector<16x1xf32> to vector<1x16x1xf32>
    %cst_14 = arith.constant dense<0.000000e+00> : vector<1xf32>
    %51 = vector.multi_reduction <add>, %50, %cst_14 [1, 2] : vector<1x16x1xf32> to vector<1xf32>
    %52 = vector.shape_cast %51 : vector<1xf32> to vector<1x1x1xf32>
    %53 = vector.extract %52[0, 0, 0] : f32 from vector<1x1x1xf32>
    %54 = vector.broadcast %53 : f32 to vector<1x8x128xf32>
    %c0_15 = arith.constant 0 : index
    %c0_16 = arith.constant 0 : index
    %c0_17 = arith.constant 0 : index
    %55 = vector.load %arg2[%c0_15, %c0_16, %c0_17] : memref<1x8x128xf32, #tpu.memory_space<vmem>>, vector<1x8x128xf32>
    tpu.vector_store %arg2[%c0_15, %c0_16, %c0_17], %54 {strides = array<i32>} : memref<1x8x128xf32, #tpu.memory_space<vmem>>, vector<1x8x128xf32>,
    return
  }
  func.func @transform_0(%arg0: i32) -> (i32, i32) {
    %c0_i32 = arith.constant 0 : i32
    %c0_i32_0 = arith.constant 0 : i32
    return %arg0, %c0_i32 : i32, i32
  }
  func.func @transform_1(%arg0: i32) -> (i32, i32, i32) {
    %c0_i32 = arith.constant 0 : i32
    %c0_i32_0 = arith.constant 0 : i32
    %c0_i32_1 = arith.constant 0 : i32
    return %arg0, %c0_i32, %c0_i32_0 : i32, i32, i32
  }
}

</mosaic_0001>

<llo_original>
// kernel: tpu_custom_call.1
$region0: #{tpu_custom_call.1}
  #allocation0 [shape = 'u32[]', space=smem, size = 0x4, offset = 0x4, fixed_abs, tag = 'smem constant byte address 0x4 - core index']
  #allocation1 [shape = 'u32[144,128]{1,0:T(1,128)}', space=vmem, size = 0x12000, scoped, tag = 'internal scratch']
  %s0 = inlined_call_operand.hbm [shape: f32[16,1536], index: 0, kind: input, shape index: {}]
  %s1 = inlined_call_operand.hbm [shape: f32[1,8,128], index: 1, kind: output, shape index: {}]
  %s2 = sld [smem:[#allocation0]]
  $region18: #{tpu_custom_call.1} parent=0
    _
  %s4 = ssub.s32 1, %s2
  %s5 = scalar_select 0, %s4, %s2
  $region1: #{tpu_custom_call.1} parent=0
    #allocation2 [shape = 'u8[98304]{0}', space=vmem, size = 0x18000, scoped, tag = 'input window, operand 0, single buffered']
    #allocation3 [shape = 's32[1]{0}', space=sflag, size = 0x4, scoped, tag = 'scoped memory for tpu_custom_call.1']
    #allocation4 [shape = 's32[1]{0}', space=sflag, size = 0x4, scoped, tag = 'scoped memory for tpu_custom_call.1']
    #allocation5 [shape = 'u8[4096]{0}', space=vmem, size = 0x1000, scoped, tag = 'output window, operand 0, single buffered']
    %6 = vsyncpa [#allocation3], 0
    %7 = vsyncpa [#allocation4], 0
    // Predicated region
    $region2: #{tpu_custom_call.1} parent=1 // pred_check
      _
    $region3: #{tpu_custom_call.1} parent=1 // pred_check_branch
      %9 = sbr.rel (0) target = $region5
    $region4: #{tpu_custom_call.1} parent=1 // pred_region
      %s11 = ssub.s32 3072, 3072
      %12 = vsyncadd [#allocation3], %s11
      %s13 = sshll.u32 [#allocation2], 4
      %s14 = int_to_ptr.vmem [resolvable:$true] %s13
      %19 = dma.hbm_to_vmem [thread:$0]  %s0, 3072, %s14, [#allocation3], 1536, 1536, 96
    $region5: #{tpu_custom_call.1} parent=1 // pred_fallthru
      _
    // Predicated region
    $region6: #{tpu_custom_call.1} parent=1 // pred_check
      _
    $region7: #{tpu_custom_call.1} parent=1 // pred_check_branch
      %21 = sbr.rel (0) target = $region9
    $region8: #{tpu_custom_call.1} parent=1 // pred_region
      %22 = dma.done [#allocation3], 3072
    $region9: #{tpu_custom_call.1} parent=1 // pred_fallthru
      _
    %v23 = vld [vmem:[#allocation2] sm:$0xff]
    %v24 = vld [vmem:[#allocation2 + $0x8] sm:$0xff]
    %v25 = vld [vmem:[#allocation2 + $0x60] sm:$0xff]
    %v26 = vld [vmem:[#allocation2 + $0x68] sm:$0xff]
    %v27 = vld [vmem:[#allocation2 + $0x10] sm:$0xff]
    %v28 = vld [vmem:[#allocation2 + $0x18] sm:$0xff]
    %v29 = vld [vmem:[#allocation2 + $0x70] sm:$0xff]
    %v30 = vld [vmem:[#allocation2 + $0x78] sm:$0xff]
    %v31 = vld [vmem:[#allocation2 + $0x20] sm:$0xff]
    %v32 = vld [vmem:[#allocation2 + $0x28] sm:$0xff]
    %v33 = vld [vmem:[#allocation2 + $0x80] sm:$0xff]
    %v34 = vld [vmem:[#allocation2 + $0x88] sm:$0xff]
    %v35 = vld [vmem:[#allocation2 + $0x30] sm:$0xff]
    %v36 = vld [vmem:[#allocation2 + $0x38] sm:$0xff]
    %v37 = vld [vmem:[#allocation2 + $0x90] sm:$0xff]
    %v38 = vld [vmem:[#allocation2 + $0x98] sm:$0xff]
    %v39 = vld [vmem:[#allocation2 + $0x40] sm:$0xff]
    %v40 = vld [vmem:[#allocation2 + $0x48] sm:$0xff]
    %v41 = vld [vmem:[#allocation2 + $0xa0] sm:$0xff]
    %v42 = vld [vmem:[#allocation2 + $0xa8] sm:$0xff]
    %v43 = vld [vmem:[#allocation2 + $0x50] sm:$0xff]
    %v44 = vld [vmem:[#allocation2 + $0x58] sm:$0xff]
    %v45 = vld [vmem:[#allocation2 + $0xb0] sm:$0xff]
    %v46 = vld [vmem:[#allocation2 + $0xb8] sm:$0xff]
    %v47 = vmul.f32 %v23, %v31
    %v48 = vmul.f32 %v24, %v32
    %v49 = vmul.f32 %v25, %v33
    %v50 = vmul.f32 %v26, %v34
    %v51 = vmul.f32 %v27, %v35
    %v52 = vmul.f32 %v28, %v36
    %v53 = vmul.f32 %v29, %v37
    %v54 = vmul.f32 %v30, %v38
    %v55 = vsub.f32 %v47, %v51
    %v56 = vsub.f32 %v48, %v52
    %v57 = vsub.f32 %v49, %v53
    %v58 = vsub.f32 %v50, %v54
    %v59 = vsub.f32 %v55, %v39
    %v60 = vsub.f32 %v56, %v40
    %v61 = vsub.f32 %v57, %v41
    %v62 = vsub.f32 %v58, %v42
    %v63 = vmul.f32 %v23, %v35
    %v64 = vmul.f32 %v24, %v36
    %v65 = vmul.f32 %v25, %v37
    %v66 = vmul.f32 %v26, %v38
    %v67 = vadd.f32 %v63, %v27
    %v68 = vadd.f32 %v64, %v28
    %v69 = vadd.f32 %v65, %v29
    %v70 = vadd.f32 %v66, %v30
    %v71 = vadd.f32 %v67, %v31
    %v72 = vadd.f32 %v68, %v32
    %v73 = vadd.f32 %v69, %v33
    %v74 = vadd.f32 %v70, %v34
    %v75 = vsub.f32 %v71, %v43
    %v76 = vsub.f32 %v72, %v44
    %v77 = vsub.f32 %v73, %v45
    %v78 = vsub.f32 %v74, %v46
    %v79 = vmul.f32 %v59, %v59
    %v80 = vmul.f32 %v60, %v60
    %v81 = vmul.f32 %v61, %v61
    %v82 = vmul.f32 %v62, %v62
    %v83 = vmul.f32 %v75, %v75
    %v84 = vmul.f32 %v76, %v76
    %v85 = vmul.f32 %v77, %v77
    %v86 = vmul.f32 %v78, %v78
    %v87 = vadd.f32 %v79, %v83
    %v88 = vadd.f32 %v80, %v84
    %v89 = vadd.f32 %v81, %v85
    %v90 = vadd.f32 %v82, %v86
    %v91 = vrsqrt.pop %v87
    %v92 = vmul.f32 %v87, %v91
    %vm93 = vcmp.eq.f32.partialorder %v87, inf
    %v94 = vsel %vm93, %v87, %v92
    %vm95 = vcmp.eq.f32.partialorder %v87, 0.0
    %v96 = vand.u32 %v87, 2147483648
    %v97 = vsel %vm95, %v96, %v94
    %v98 = vrsqrt.pop %v88
    %v99 = vmul.f32 %v88, %v98
    %vm100 = vcmp.eq.f32.partialorder %v88, inf
    %v101 = vsel %vm100, %v88, %v99
    %vm102 = vcmp.eq.f32.partialorder %v88, 0.0
    %v103 = vand.u32 %v88, 2147483648
    %v104 = vsel %vm102, %v103, %v101
    %v105 = vrsqrt.pop %v89
    %v106 = vmul.f32 %v89, %v105
    %vm107 = vcmp.eq.f32.partialorder %v89, inf
    %v108 = vsel %vm107, %v89, %v106
    %vm109 = vcmp.eq.f32.partialorder %v89, 0.0
    %v110 = vand.u32 %v89, 2147483648
    %v111 = vsel %vm109, %v110, %v108
    %v112 = vrsqrt.pop %v90
    %v113 = vmul.f32 %v90, %v112
    %vm114 = vcmp.eq.f32.partialorder %v90, inf
    %v115 = vsel %vm114, %v90, %v113
    %vm116 = vcmp.eq.f32.partialorder %v90, 0.0
    %v117 = vand.u32 %v90, 2147483648
    %v118 = vsel %vm116, %v117, %v115
    %v119 = vadd.f32 %v97, %v104
    %120 = vadd.xlane.f32.xlu0 %v119
    %v121 = vpop.xlane.xlu0 %120
    %v122 = vadd.f32 %v111, %v118
    %123 = vadd.xlane.f32.xlu0 %v122
    %v124 = vpop.xlane.xlu0 %123
    %s125 = smul.u32 0, 16
    %v126 = vlaneseq
    %v127 = vshrl.u32 %v126, 7
    %v128 = vadd.s32 %v127, 8
    %v129 = vstv %s125
    %v130 = vadd.s32 %v129, %v127
    %v131 = vadd.s32 %v129, %v128
    %vm132 = vcmp.lt.s32.totalorder %v130, 16
    %vm133 = vcmp.lt.s32.totalorder %v131, 16
    %v134 = vsub.f32 0.0, %v121
    %v135 = vsub.f32 0.0, %v124
    %v136 = vsub.f32 0.0, %v134
    %v137 = vsub.f32 0.0, %v135
    %v138 = vmax.f32 %v136, 0.0
    %v139 = vmax.f32 %v137, 0.0
    %vm140 = vcmp.ne.f32.partialorder %v136, %v136
    %vm141 = vcmp.ne.f32.partialorder %v137, %v137
    %v142 = vadd.f32 %v136, 0.0
    %v143 = vadd.f32 %v137, 0.0
    %v144 = vand.u32 2147483647, %v136
    %v145 = vand.u32 2147483647, %v137
    %v146 = vsub.f32 0.0, %v144
    %v147 = vsub.f32 0.0, %v145
    %v148 = vmul.f32 %v146, 1.442695
    %v149 = vpow.pop %v148
    %v150 = vmul.f32 %v147, 1.442695
    %v151 = vpow.pop %v150
    %v152 = vadd.f32 %v149, 1.0
    %v153 = vlog2.pop %v152
    %v154 = vmul.f32 %v153, 0.6931472
    %v155 = vmul.f32 -0.5, %v149
    %v156 = vadd.f32 %v155, 1.0
    %v157 = vmul.f32 %v156, %v149
    %v158 = vand.u32 2147483647, %v149
    %vm159 = vcmp.lt.f32.partialorder %v158, 0.0004427343
    %v160 = vsel %vm159, %v157, %v154
    %v161 = vadd.f32 %v151, 1.0
    %v162 = vlog2.pop %v161
    %v163 = vmul.f32 %v162, 0.6931472
    %v164 = vmul.f32 -0.5, %v151
    %v165 = vadd.f32 %v164, 1.0
    %v166 = vmul.f32 %v165, %v151
    %v167 = vand.u32 2147483647, %v151
    %vm168 = vcmp.lt.f32.partialorder %v167, 0.0004427343
    %v169 = vsel %vm168, %v166, %v163
    %v170 = vadd.f32 %v138, %v160
    %v171 = vadd.f32 %v139, %v169
    %v172 = vsel %vm140, %v142, %v170
    %v173 = vsel %vm141, %v143, %v171
    %v174 = vsub.f32 0.0, %v172
    %v175 = vsub.f32 0.0, %v173
    %v176 = vsub.f32 0.0, %v174
    %v177 = vsub.f32 0.0, %v175
    %v178 = vsel %vm132, %v176, 0.0
    %v179 = vsel %vm133, %v177, 0.0
    %vm180 = vcmask 7168
    %v181 = vsel %vm180, %v178, 0.0
    %v182 = vsel %vm180, %v179, 0.0
    %v183 = vadd.f32 %v181, %v182
    %184 = vadd.xlane.f32.xlu0 %v183
    %v185 = vpop.xlane.xlu0 %184
    %v186 = vrot.slane %v185, 4
    %v187 = vadd.f32 %v185, %v186
    %v188 = vrot.slane %v187, 2
    %v189 = vadd.f32 %v187, %v188
    %v190 = vrot.slane %v189, 1
    %v191 = vadd.f32 %v189, %v190
    %s192 = vtos %v191
    %v193 = vstv %s192
    %194 = vst [vmem:[#allocation5] sm:$0xff] %v193
    // Predicated region
    $region10: #{tpu_custom_call.1} parent=1 // pred_check
      _
    $region11: #{tpu_custom_call.1} parent=1 // pred_check_branch
      %196 = sbr.rel (0) target = $region13
    $region12: #{tpu_custom_call.1} parent=1 // pred_region
      %s198 = ssub.s32 128, 128
      %199 = vsyncadd [#allocation4], %s198
      %s201 = sshll.u32 [#allocation5], 4
      %s202 = int_to_ptr.vmem [resolvable:$true] %s201
      %204 = dma.vmem_to_hbm [thread:$0]  %s202, 128, %s1, [#allocation4]
    $region13: #{tpu_custom_call.1} parent=1 // pred_fallthru
      _
    // Predicated region
    $region14: #{tpu_custom_call.1} parent=1 // pred_check
      _
    $region15: #{tpu_custom_call.1} parent=1 // pred_check_branch
      %206 = sbr.rel (0) target = $region17
    $region16: #{tpu_custom_call.1} parent=1 // pred_region
      %207 = dma.done [#allocation4], 128
    $region17: #{tpu_custom_call.1} parent=1 // pred_fallthru
      _
    %208 = vsyncpa [#allocation3], 1
    %209 = vsyncpa [#allocation4], 1

</llo_original>
